<compile_context>
chip_gen: v7x
topology: tpu7x:2x2x1
jax: 0.10.0
libtpu: 0.0.40
codegen_flags: <defaults>
</compile_context>

<pallas_src>
import functools

import jax
import jax.numpy as jnp
from jax import lax
from jax.experimental import pallas as pl
from jax.experimental.pallas import tpu as pltpu


def _round_up(x, m):
    return ((x + m - 1) // m) * m


# ----------------------------------------------------------------------------
# Parameter plumbing (hoisted out of the forward; run once per param update).
# ----------------------------------------------------------------------------
def prepare_tables(user_factors, item_factors, user_biases, item_biases):
    """Fold biases into transposed, padded factor tables.

    Row layout:
        utab = [user_factors.T ; user_bias ; 1]   (R, n_users)
        itab = [item_factors.T ; 1 ; item_bias]   (R, n_items)
    so a single sublane-sum of utab[:, u] * itab[:, i] yields
    factors-dot + user_bias + item_bias.  Padded to (R_pad % 8, V_pad % 128).
    """
    n_users, n_factors = user_factors.shape
    n_items, _ = item_factors.shape

    utab = jnp.concatenate([user_factors.T.astype(jnp.float32),
                            user_biases.T.astype(jnp.float32),
                            jnp.ones((1, n_users), jnp.float32)], axis=0)
    itab = jnp.concatenate([item_factors.T.astype(jnp.float32),
                            jnp.ones((1, n_items), jnp.float32),
                            item_biases.T.astype(jnp.float32)], axis=0)

    r = n_factors + 2
    r_pad = _round_up(r, 8)
    utab = jnp.pad(utab, ((0, r_pad - r),
                          (0, _round_up(n_users, 128) - n_users)))
    itab = jnp.pad(itab, ((0, r_pad - r),
                          (0, _round_up(n_items, 128) - n_items)))
    return utab, itab


# ----------------------------------------------------------------------------
# Kernels.
# ----------------------------------------------------------------------------
def mf_gather_kernel(uidx_ref, iidx_ref, utab_ref, itab_ref, out_ref):
    """Primary path: fused embedding lookup via a lane gather.

    Shapes (per grid step):
      uidx_ref, iidx_ref : (1, TB)      int32  ids, lane-dense
      utab_ref           : (R, NUpad)   f32    [factors; u_bias; 1].T (padded)
      itab_ref           : (R, NIpad)   f32    [factors; 1; i_bias].T (padded)
      out_ref            : (1, TB)      f32    predictions, lane-dense
    """
    uidx = uidx_ref[0, :]                                        # (TB,)
    iidx = iidx_ref[0, :]
    # Ids are in-range by the nn.Embedding contract -> no bounds logic needed.
    u = jnp.take(utab_ref[...], uidx, axis=1,
                 mode="promise_in_bounds")                       # (R, TB)
    v = jnp.take(itab_ref[...], iidx, axis=1,
                 mode="promise_in_bounds")                       # (R, TB)
    # [factors; u_bias; 1] * [factors; 1; i_bias] summed over sublanes
    #   = factors-dot + user_bias + item_bias.
    out_ref[...] = jnp.sum(u * v, axis=0, keepdims=True)         # (1, TB)


def mf_onehot_kernel(uidx_ref, iidx_ref, utab_ref, itab_ref, out_ref):
    """Fallback path (only used if the lane gather fails to lower).

    One-hot selection on the MXU, but per the review: bf16 one-hots (0/1 is
    exact), tables split into bf16 hi/lo halves so the f32 selection is exact
    with 2 MXU passes per table (vs 6 at f32 HIGHEST), and one shared iota.
    """
    tb = out_ref.shape[-1]
    nu = utab_ref.shape[-1]
    ni = itab_ref.shape[-1]

    iota_u = lax.broadcasted_iota(jnp.int32, (nu, tb), 0)
    iota_i = iota_u if ni == nu else lax.broadcasted_iota(jnp.int32, (ni, tb), 0)
    u_onehot = (iota_u == uidx_ref[...]).astype(jnp.bfloat16)    # (NU, TB)
    i_onehot = (iota_i == iidx_ref[...]).astype(jnp.bfloat16)    # (NI, TB)

    def split_select(tab, onehot):
        hi = tab.astype(jnp.bfloat16)
        lo = (tab - hi.astype(jnp.float32)).astype(jnp.bfloat16)
        return (jnp.dot(hi, onehot, preferred_element_type=jnp.float32)
                + jnp.dot(lo, onehot, preferred_element_type=jnp.float32))

    u = split_select(utab_ref[...], u_onehot)                    # (R, TB)
    v = split_select(itab_ref[...], i_onehot)                    # (R, TB)
    out_ref[...] = jnp.sum(u * v, axis=0, keepdims=True)         # (1, TB)


# ----------------------------------------------------------------------------
# Forward.
# ----------------------------------------------------------------------------
def matrix_factorization_forward(user, item, utab, itab, *, tile_b=4096,
                                 gather="lane"):
    """user, item: int (B,).  utab/itab come from prepare_tables().
    Returns predictions matching torch's .squeeze()."""
    r_pad, nu_pad = utab.shape
    _, ni_pad = itab.shape
    assert r_pad % 8 == 0 and nu_pad % 128 == 0 and ni_pad % 128 == 0, \
        "tables must come from prepare_tables()"
    B = user.shape[0]

    # --- batch tiling: lane-dense ids, tile forced to a multiple of 128 ------
    tile_b = max(128, _round_up(tile_b, 128))
    b128 = _round_up(B, 128)
    TB = min(tile_b, b128)
    # v7x megacore: prefer >= 2 grid steps when the batch is big enough.
    if b128 // TB < 2 and b128 >= 256:
        TB = _round_up(b128 // 2, 128)
    B_pad = _round_up(B, TB)

    uidx = jnp.pad(user.astype(jnp.int32), (0, B_pad - B)).reshape(1, B_pad)
    iidx = jnp.pad(item.astype(jnp.int32), (0, B_pad - B)).reshape(1, B_pad)

    # --- explicit VMEM budget -------------------------------------------------
    table_bytes = 4 * r_pad * (nu_pad + ni_pad)          # single-buffered tables
    stream_bytes = (2 * 2 + 1 * 2) * 4 * TB              # dbl-buffered ids + out
    work_bytes = 2 * 4 * r_pad * TB                      # gathered u, v tiles
    if gather != "lane":
        work_bytes += 2 * 2 * (nu_pad + ni_pad) * TB     # bf16 one-hots
    vmem_limit = int(min(max(2 * (table_bytes + stream_bytes + work_bytes),
                             32 << 20), 64 << 20))       # 64 MiB cap: v7x-safe

    kernel = mf_gather_kernel if gather == "lane" else mf_onehot_kernel
    out = pl.pallas_call(
        kernel,
        out_shape=jax.ShapeDtypeStruct((1, B_pad), jnp.float32),
        grid=(B_pad // TB,),
        in_specs=[
            pl.BlockSpec((1, TB), lambda i: (0, i)),             # user ids tile
            pl.BlockSpec((1, TB), lambda i: (0, i)),             # item ids tile
            pl.BlockSpec((r_pad, nu_pad), lambda i: (0, 0),      # resident user
                         pipeline_mode=pl.Buffered(1)),          #   table
            pl.BlockSpec((r_pad, ni_pad), lambda i: (0, 0),      # resident item
                         pipeline_mode=pl.Buffered(1)),          #   table
        ],
        out_specs=pl.BlockSpec((1, TB), lambda i: (0, i)),
        compiler_params=pltpu.CompilerParams(
            dimension_semantics=("parallel",),
            vmem_limit_bytes=vmem_limit),
    )(uidx, iidx, utab, itab)

    pred = out[:, :B]                     # drop padded lanes -> (1, B)
    # torch .squeeze(): (B,) for B > 1, 0-d scalar for B == 1.
    return jnp.squeeze(pred)


def init_params(key, n_users, n_items, n_factors):
    """Deterministic parameter init mirroring the PyTorch module's __init__."""
    ku, ki = jax.random.split(key)
    # xavier_uniform_: U(-a, a), a = sqrt(6 / (fan_in + fan_out))
    a_u = (6.0 / (n_users + n_factors)) ** 0.5
    a_i = (6.0 / (n_items + n_factors)) ** 0.5
    user_factors = jax.random.uniform(ku, (n_users, n_factors), jnp.float32,
                                      minval=-a_u, maxval=a_u)
    item_factors = jax.random.uniform(ki, (n_items, n_factors), jnp.float32,
                                      minval=-a_i, maxval=a_i)
    user_biases = jnp.zeros((n_users, 1), jnp.float32)
    item_biases = jnp.zeros((n_items, 1), jnp.float32)
    return user_factors, item_factors, user_biases, item_biases


if __name__ == "__main__":
    n_users, n_items, n_factors = 12, 9, 20
    batch = 8

    root = jax.random.PRNGKey(0)
    k_params, k_user, k_item = jax.random.split(root, 3)

    user_factors, item_factors, user_biases, item_biases = init_params(
        k_params, n_users, n_items, n_factors)

    user = jax.random.randint(k_user, (batch,), 0, n_users, dtype=jnp.int32)
    item = jax.random.randint(k_item, (batch,), 0, n_items, dtype=jnp.int32)

    # Hoisted parameter plumbing: done ONCE, not per forward call.
    utab, itab = prepare_tables(user_factors, item_factors,
                                user_biases, item_biases)
    utab, itab = jax.block_until_ready((utab, itab))

    def run(gather_mode):
        fwd = jax.jit(functools.partial(matrix_factorization_forward,
                                        gather=gather_mode))
        return jax.block_until_ready(fwd(user, item, utab, itab))

    try:
        pred = run("lane")
    except Exception:
        # Mosaic build without lane-gather lowering: use the (still exact)
        # bf16 hi/lo one-hot fallback kernel.
        pred = run("onehot")

    # Pure-JAX reference for sanity.
    ref = (user_biases[user] + item_biases[item]
           + (user_factors[user] * item_factors[item]).sum(1, keepdims=True)
           ).squeeze(1)
    assert pred.shape == (batch,), pred.shape
    assert jnp.allclose(pred, ref, atol=1e-4, rtol=1e-4), \
        f"max abs err {jnp.max(jnp.abs(pred - ref))}"

    print("KERNEL_OK")
</pallas_src>

<mosaic_0001>
module attributes {stable_mosaic.version = 11 : i64} {
  func.func @mf_onehot_kernel(%arg0: i32, %arg1: memref<1x128xi32, #tpu.memory_space<vmem>>, %arg2: memref<1x128xi32, #tpu.memory_space<vmem>>, %arg3: memref<24x128xf32, #tpu.memory_space<vmem>>, %arg4: memref<24x128xf32, #tpu.memory_space<vmem>>, %arg5: memref<1x128xf32, #tpu.memory_space<vmem>>) attributes {dimension_semantics = [#tpu.dimension_semantics<parallel>], iteration_bounds = array<i64: 1>, scalar_prefetch = 0 : i64, scratch_operands = 0 : i64, tpu.core_type = #tpu.core_type<tc>, window_params = [{transform_indices = @transform_0, window_bounds = array<i64: 1, 128>}, {transform_indices = @transform_1, window_bounds = array<i64: 1, 128>}, {pipeline_mode = #tpu.pipeline_mode<synchronous>, transform_indices = @transform_2, window_bounds = array<i64: 24, 128>}, {pipeline_mode = #tpu.pipeline_mode<synchronous>, transform_indices = @transform_3, window_bounds = array<i64: 24, 128>}, {transform_indices = @transform_4, window_bounds = array<i64: 1, 128>}]} {
    %0 = tpu.iota {dimensions = array<i32: 0>} : vector<128x128xi32>
    %c0 = arith.constant 0 : index
    %c0_0 = arith.constant 0 : index
    %1 = vector.load %arg1[%c0, %c0_0] : memref<1x128xi32, #tpu.memory_space<vmem>>, vector<1x128xi32>
    %2 = vector.broadcast %1 : vector<1x128xi32> to vector<128x128xi32>
    %3 = arith.cmpi eq, %0, %2 : vector<128x128xi32>
    %4 = arith.extui %3 : vector<128x128xi1> to vector<128x128xi32>
    %5 = arith.sitofp %4 : vector<128x128xi32> to vector<128x128xf32>
    %6 = arith.truncf %5 : vector<128x128xf32> to vector<128x128xbf16>
    %c0_1 = arith.constant 0 : index
    %c0_2 = arith.constant 0 : index
    %7 = vector.load %arg2[%c0_1, %c0_2] : memref<1x128xi32, #tpu.memory_space<vmem>>, vector<1x128xi32>
    %8 = vector.broadcast %7 : vector<1x128xi32> to vector<128x128xi32>
    %9 = arith.cmpi eq, %0, %8 : vector<128x128xi32>
    %10 = arith.extui %9 : vector<128x128xi1> to vector<128x128xi32>
    %11 = arith.sitofp %10 : vector<128x128xi32> to vector<128x128xf32>
    %12 = arith.truncf %11 : vector<128x128xf32> to vector<128x128xbf16>
    %c0_3 = arith.constant 0 : index
    %c0_4 = arith.constant 0 : index
    %13 = vector.load %arg3[%c0_3, %c0_4] : memref<24x128xf32, #tpu.memory_space<vmem>>, vector<24x128xf32>
    %14 = arith.truncf %13 : vector<24x128xf32> to vector<24x128xbf16>
    %15 = arith.extf %14 : vector<24x128xbf16> to vector<24x128xf32>
    %16 = arith.subf %13, %15 : vector<24x128xf32>
    %17 = arith.truncf %16 : vector<24x128xf32> to vector<24x128xbf16>
    %cst = arith.constant dense<0.000000e+00> : vector<24x128xf32>
    %18 = tpu.matmul %14, %6, %cst {dimension_numbers = #tpu.dot_dimension_numbers<[1], [0], [0], [1], [0, 0, 1, 1], [], []>} : vector<24x128xbf16>, vector<128x128xbf16>, vector<24x128xf32> -> vector<24x128xf32>
    %cst_5 = arith.constant dense<0.000000e+00> : vector<24x128xf32>
    %19 = tpu.matmul %17, %6, %cst_5 {dimension_numbers = #tpu.dot_dimension_numbers<[1], [0], [0], [1], [0, 0, 1, 1], [], []>} : vector<24x128xbf16>, vector<128x128xbf16>, vector<24x128xf32> -> vector<24x128xf32>
    %20 = arith.addf %18, %19 : vector<24x128xf32>
    %c0_6 = arith.constant 0 : index
    %c0_7 = arith.constant 0 : index
    %21 = vector.load %arg4[%c0_6, %c0_7] : memref<24x128xf32, #tpu.memory_space<vmem>>, vector<24x128xf32>
    %22 = arith.truncf %21 : vector<24x128xf32> to vector<24x128xbf16>
    %23 = arith.extf %22 : vector<24x128xbf16> to vector<24x128xf32>
    %24 = arith.subf %21, %23 : vector<24x128xf32>
    %25 = arith.truncf %24 : vector<24x128xf32> to vector<24x128xbf16>
    %cst_8 = arith.constant dense<0.000000e+00> : vector<24x128xf32>
    %26 = tpu.matmul %22, %12, %cst_8 {dimension_numbers = #tpu.dot_dimension_numbers<[1], [0], [0], [1], [0, 0, 1, 1], [], []>} : vector<24x128xbf16>, vector<128x128xbf16>, vector<24x128xf32> -> vector<24x128xf32>
    %cst_9 = arith.constant dense<0.000000e+00> : vector<24x128xf32>
    %27 = tpu.matmul %25, %12, %cst_9 {dimension_numbers = #tpu.dot_dimension_numbers<[1], [0], [0], [1], [0, 0, 1, 1], [], []>} : vector<24x128xbf16>, vector<128x128xbf16>, vector<24x128xf32> -> vector<24x128xf32>
    %28 = arith.addf %26, %27 : vector<24x128xf32>
    %29 = arith.mulf %20, %28 : vector<24x128xf32>
    %cst_10 = arith.constant dense<0.000000e+00> : vector<128xf32>
    %30 = vector.multi_reduction <add>, %29, %cst_10 [0] : vector<24x128xf32> to vector<128xf32>
    %31 = vector.shape_cast %30 : vector<128xf32> to vector<1x128xf32>
    %c0_11 = arith.constant 0 : index
    %c0_12 = arith.constant 0 : index
    %32 = vector.load %arg5[%c0_11, %c0_12] : memref<1x128xf32, #tpu.memory_space<vmem>>, vector<1x128xf32>
    tpu.vector_store %arg5[%c0_11, %c0_12], %31 {strides = array<i32>} : memref<1x128xf32, #tpu.memory_space<vmem>>, vector<1x128xf32>,
    return
  }
  func.func @transform_0(%arg0: i32) -> (i32, i32) {
    %c0_i32 = arith.constant 0 : i32
    %c0_i32_0 = arith.constant 0 : i32
    return %c0_i32, %arg0 : i32, i32
  }
  func.func @transform_1(%arg0: i32) -> (i32, i32) {
    %c0_i32 = arith.constant 0 : i32
    %c0_i32_0 = arith.constant 0 : i32
    return %c0_i32, %arg0 : i32, i32
  }
  func.func @transform_2(%arg0: i32) -> (i32, i32) {
    %c0_i32 = arith.constant 0 : i32
    %c0_i32_0 = arith.constant 0 : i32
    %c0_i32_1 = arith.constant 0 : i32
    return %c0_i32, %c0_i32_0 : i32, i32
  }
  func.func @transform_3(%arg0: i32) -> (i32, i32) {
    %c0_i32 = arith.constant 0 : i32
    %c0_i32_0 = arith.constant 0 : i32
    %c0_i32_1 = arith.constant 0 : i32
    return %c0_i32, %c0_i32_0 : i32, i32
  }
  func.func @transform_4(%arg0: i32) -> (i32, i32) {
    %c0_i32 = arith.constant 0 : i32
    %c0_i32_0 = arith.constant 0 : i32
    return %c0_i32, %arg0 : i32, i32
  }
}

</mosaic_0001>

<llo_original>
// kernel: matrix_factorization_forward.1
$region0: #{matrix_factorization_forward.1}
  #allocation0 [shape = 'u32[]', space=smem, size = 0x4, offset = 0x4, fixed_abs, tag = 'smem constant byte address 0x4 - core index']
  #allocation1 [shape = 'u32[144,128]{1,0:T(1,128)}', space=vmem, size = 0x12000, scoped, tag = 'internal scratch']
  %s0 = inlined_call_operand.vmem [shape: s32[1,128], index: 0, kind: input, shape index: {}]
  %s1 = inlined_call_operand.vmem [shape: s32[1,128], index: 1, kind: input, shape index: {}]
  %s2 = inlined_call_operand.hbm [shape: f32[24,128], index: 2, kind: input, shape index: {}]
  %s3 = inlined_call_operand.hbm [shape: f32[24,128], index: 3, kind: input, shape index: {}]
  %s4 = inlined_call_operand.vmem [shape: f32[1,128], index: 4, kind: output, shape index: {}]
  %s5 = sld [smem:[#allocation0]]
  $region34: #{matrix_factorization_forward.1} parent=0
    _
  %s7 = ssub.s32 1, %s5
  %s8 = scalar_select 0, %s7, %s5
  $region1: #{matrix_factorization_forward.1} parent=0
    #allocation2 [shape = 'u8[12288]{0}', space=vmem, size = 0x3000, scoped, tag = 'input window, operand 2, single buffered']
    #allocation3 [shape = 's32[1]{0}', space=sflag, size = 0x4, scoped, tag = 'scoped memory for matrix_factorization_forward.1']
    #allocation4 [shape = 'u8[12288]{0}', space=vmem, size = 0x3000, scoped, tag = 'input window, operand 3, single buffered']
    #allocation5 [shape = 's32[1]{0}', space=sflag, size = 0x4, scoped, tag = 'scoped memory for matrix_factorization_forward.1']
    %9 = vsyncpa [#allocation3], 0
    %10 = vsyncpa [#allocation5], 0
    // Predicated region
    $region2: #{matrix_factorization_forward.1} parent=1 // pred_check
      _
    $region3: #{matrix_factorization_forward.1} parent=1 // pred_check_branch
      %12 = sbr.rel (0) target = $region5
    $region4: #{matrix_factorization_forward.1} parent=1 // pred_region
      _
    $region5: #{matrix_factorization_forward.1} parent=1 // pred_fallthru
      _
    // Predicated region
    $region6: #{matrix_factorization_forward.1} parent=1 // pred_check
      _
    $region7: #{matrix_factorization_forward.1} parent=1 // pred_check_branch
      %14 = sbr.rel (0) target = $region9
    $region8: #{matrix_factorization_forward.1} parent=1 // pred_region
      _
    $region9: #{matrix_factorization_forward.1} parent=1 // pred_fallthru
      _
    // Predicated region
    $region10: #{matrix_factorization_forward.1} parent=1 // pred_check
      _
    $region11: #{matrix_factorization_forward.1} parent=1 // pred_check_branch
      %16 = sbr.rel (0) target = $region13
    $region12: #{matrix_factorization_forward.1} parent=1 // pred_region
      %s18 = ssub.s32 384, 384
      %19 = vsyncadd [#allocation3], %s18
      %s20 = sshll.u32 [#allocation2], 4
      %s21 = int_to_ptr.vmem [resolvable:$true] %s20
      %26 = dma.hbm_to_vmem [thread:$0]  %s2, 384, %s21, [#allocation3], 128, 128, 8
    $region13: #{matrix_factorization_forward.1} parent=1 // pred_fallthru
      _
    // Predicated region
    $region14: #{matrix_factorization_forward.1} parent=1 // pred_check
      _
    $region15: #{matrix_factorization_forward.1} parent=1 // pred_check_branch
      %28 = sbr.rel (0) target = $region17
    $region16: #{matrix_factorization_forward.1} parent=1 // pred_region
      %s30 = ssub.s32 384, 384
      %31 = vsyncadd [#allocation5], %s30
      %s32 = sshll.u32 [#allocation4], 4
      %s33 = int_to_ptr.vmem [resolvable:$true] %s32
      %38 = dma.hbm_to_vmem [thread:$0]  %s3, 384, %s33, [#allocation5], 128, 128, 8
    $region17: #{matrix_factorization_forward.1} parent=1 // pred_fallthru
      _
    // Predicated region
    $region18: #{matrix_factorization_forward.1} parent=1 // pred_check
      _
    $region19: #{matrix_factorization_forward.1} parent=1 // pred_check_branch
      %40 = sbr.rel (0) target = $region21
    $region20: #{matrix_factorization_forward.1} parent=1 // pred_region
      %41 = dma.done [#allocation3], 384
    $region21: #{matrix_factorization_forward.1} parent=1 // pred_fallthru
      _
    // Predicated region
    $region22: #{matrix_factorization_forward.1} parent=1 // pred_check
      _
    $region23: #{matrix_factorization_forward.1} parent=1 // pred_check_branch
      %43 = sbr.rel (0) target = $region25
    $region24: #{matrix_factorization_forward.1} parent=1 // pred_region
      %44 = dma.done [#allocation5], 384
    $region25: #{matrix_factorization_forward.1} parent=1 // pred_fallthru
      _
    %v46 = vlaneseq
    %v47 = vshrl.u32 %v46, 7
    %v48 = vadd.s32 %v47, 8
    %v49 = vadd.s32 %v47, 16
    %v50 = vadd.s32 %v47, 24
    %v51 = vadd.s32 %v47, 32
    %v52 = vadd.s32 %v47, 40
    %v53 = vadd.s32 %v47, 48
    %v54 = vadd.s32 %v47, 56
    %v55 = vadd.s32 %v47, 64
    %v56 = vadd.s32 %v47, 72
    %v57 = vadd.s32 %v47, 80
    %v58 = vadd.s32 %v47, 88
    %v59 = vadd.s32 %v47, 96
    %v60 = vadd.s32 %v47, 104
    %v61 = vadd.s32 %v47, 112
    %v62 = vadd.s32 %v47, 120
    %v63 = vld [vmem:[%s0] sm:$0x1]
    %v64 = vlaneseq
    %v65 = vshrl.u32 %v64, 7
    %v66 = vsub.s32 0, %v65
    %v67 = vrot.slane %v63, %v66
    %vm68 = vcmp.eq.s32.totalorder %v47, %v67
    %vm69 = vcmp.eq.s32.totalorder %v48, %v67
    %vm70 = vcmp.eq.s32.totalorder %v49, %v67
    %vm71 = vcmp.eq.s32.totalorder %v50, %v67
    %vm72 = vcmp.eq.s32.totalorder %v51, %v67
    %vm73 = vcmp.eq.s32.totalorder %v52, %v67
    %vm74 = vcmp.eq.s32.totalorder %v53, %v67
    %vm75 = vcmp.eq.s32.totalorder %v54, %v67
    %vm76 = vcmp.eq.s32.totalorder %v55, %v67
    %vm77 = vcmp.eq.s32.totalorder %v56, %v67
    %vm78 = vcmp.eq.s32.totalorder %v57, %v67
    %vm79 = vcmp.eq.s32.totalorder %v58, %v67
    %vm80 = vcmp.eq.s32.totalorder %v59, %v67
    %vm81 = vcmp.eq.s32.totalorder %v60, %v67
    %vm82 = vcmp.eq.s32.totalorder %v61, %v67
    %vm83 = vcmp.eq.s32.totalorder %v62, %v67
    %v84 = vsel %vm68, 1, 0
    %v85 = vsel %vm69, 1, 0
    %v86 = vsel %vm70, 1, 0
    %v87 = vsel %vm71, 1, 0
    %v88 = vsel %vm72, 1, 0
    %v89 = vsel %vm73, 1, 0
    %v90 = vsel %vm74, 1, 0
    %v91 = vsel %vm75, 1, 0
    %v92 = vsel %vm76, 1, 0
    %v93 = vsel %vm77, 1, 0
    %v94 = vsel %vm78, 1, 0
    %v95 = vsel %vm79, 1, 0
    %v96 = vsel %vm80, 1, 0
    %v97 = vsel %vm81, 1, 0
    %v98 = vsel %vm82, 1, 0
    %v99 = vsel %vm83, 1, 0
    %v100 = vcvt.s32.f32 %v84
    %v101 = vcvt.s32.f32 %v85
    %v102 = vcvt.s32.f32 %v86
    %v103 = vcvt.s32.f32 %v87
    %v104 = vcvt.s32.f32 %v88
    %v105 = vcvt.s32.f32 %v89
    %v106 = vcvt.s32.f32 %v90
    %v107 = vcvt.s32.f32 %v91
    %v108 = vcvt.s32.f32 %v92
    %v109 = vcvt.s32.f32 %v93
    %v110 = vcvt.s32.f32 %v94
    %v111 = vcvt.s32.f32 %v95
    %v112 = vcvt.s32.f32 %v96
    %v113 = vcvt.s32.f32 %v97
    %v114 = vcvt.s32.f32 %v98
    %v115 = vcvt.s32.f32 %v99
    %v116 = vpack.c.bf16 %v101, %v100
    %v117 = vpack.c.bf16 %v103, %v102
    %v118 = vpack.c.bf16 %v105, %v104
    %v119 = vpack.c.bf16 %v107, %v106
    %v120 = vpack.c.bf16 %v109, %v108
    %v121 = vpack.c.bf16 %v111, %v110
    %v122 = vpack.c.bf16 %v113, %v112
    %v123 = vpack.c.bf16 %v115, %v114
    %v124 = vld [vmem:[%s1] sm:$0x1]
    %v125 = vlaneseq
    %v126 = vshrl.u32 %v125, 7
    %v127 = vsub.s32 0, %v126
    %v128 = vrot.slane %v124, %v127
    %vm129 = vcmp.eq.s32.totalorder %v47, %v128
    %vm130 = vcmp.eq.s32.totalorder %v48, %v128
    %vm131 = vcmp.eq.s32.totalorder %v49, %v128
    %vm132 = vcmp.eq.s32.totalorder %v50, %v128
    %vm133 = vcmp.eq.s32.totalorder %v51, %v128
    %vm134 = vcmp.eq.s32.totalorder %v52, %v128
    %vm135 = vcmp.eq.s32.totalorder %v53, %v128
    %vm136 = vcmp.eq.s32.totalorder %v54, %v128
    %vm137 = vcmp.eq.s32.totalorder %v55, %v128
    %vm138 = vcmp.eq.s32.totalorder %v56, %v128
    %vm139 = vcmp.eq.s32.totalorder %v57, %v128
    %vm140 = vcmp.eq.s32.totalorder %v58, %v128
    %vm141 = vcmp.eq.s32.totalorder %v59, %v128
    %vm142 = vcmp.eq.s32.totalorder %v60, %v128
    %vm143 = vcmp.eq.s32.totalorder %v61, %v128
    %vm144 = vcmp.eq.s32.totalorder %v62, %v128
    %v145 = vsel %vm129, 1, 0
    %v146 = vsel %vm130, 1, 0
    %v147 = vsel %vm131, 1, 0
    %v148 = vsel %vm132, 1, 0
    %v149 = vsel %vm133, 1, 0
    %v150 = vsel %vm134, 1, 0
    %v151 = vsel %vm135, 1, 0
    %v152 = vsel %vm136, 1, 0
    %v153 = vsel %vm137, 1, 0
    %v154 = vsel %vm138, 1, 0
    %v155 = vsel %vm139, 1, 0
    %v156 = vsel %vm140, 1, 0
    %v157 = vsel %vm141, 1, 0
    %v158 = vsel %vm142, 1, 0
    %v159 = vsel %vm143, 1, 0
    %v160 = vsel %vm144, 1, 0
    %v161 = vcvt.s32.f32 %v145
    %v162 = vcvt.s32.f32 %v146
    %v163 = vcvt.s32.f32 %v147
    %v164 = vcvt.s32.f32 %v148
    %v165 = vcvt.s32.f32 %v149
    %v166 = vcvt.s32.f32 %v150
    %v167 = vcvt.s32.f32 %v151
    %v168 = vcvt.s32.f32 %v152
    %v169 = vcvt.s32.f32 %v153
    %v170 = vcvt.s32.f32 %v154
    %v171 = vcvt.s32.f32 %v155
    %v172 = vcvt.s32.f32 %v156
    %v173 = vcvt.s32.f32 %v157
    %v174 = vcvt.s32.f32 %v158
    %v175 = vcvt.s32.f32 %v159
    %v176 = vcvt.s32.f32 %v160
    %v177 = vpack.c.bf16 %v162, %v161
    %v178 = vpack.c.bf16 %v164, %v163
    %v179 = vpack.c.bf16 %v166, %v165
    %v180 = vpack.c.bf16 %v168, %v167
    %v181 = vpack.c.bf16 %v170, %v169
    %v182 = vpack.c.bf16 %v172, %v171
    %v183 = vpack.c.bf16 %v174, %v173
    %v184 = vpack.c.bf16 %v176, %v175
    %v185 = vld [vmem:[#allocation2] sm:$0xff]
    %v186 = vld [vmem:[#allocation2 + $0x8] sm:$0xff]
    %v187 = vld [vmem:[#allocation2 + $0x10] sm:$0xff]
    %v188 = vpack.c.bf16 %v186, %v185
    %v189 = vpack.c.bf16 %v187, %v187
    %v190 = vunpack.c.l.bf16 %v188
    %v191 = vunpack.c.h.bf16 %v188
    %v192 = vunpack.c.l.bf16 %v189
    %v193 = vsub.f32 %v185, %v190
    %v194 = vsub.f32 %v186, %v191
    %v195 = vsub.f32 %v187, %v192
    %v196 = vpack.c.bf16 %v194, %v193
    %v197 = vpack.c.bf16 %v195, %v195
    %198 = vmatprep.subr.bf16.mxu0 0
    %199 = vmatpush1.bf16.msra.mxu0 %v116
    %200 = vmatprep.subr.bf16.mxu0 0
    %201 = vmatpush1.bf16.msra.mxu0 %v117
    %202 = vmatprep.subr.bf16.mxu0 0
    %203 = vmatpush1.bf16.msra.mxu0 %v118
    %204 = vmatprep.subr.bf16.mxu0 0
    %205 = vmatpush1.bf16.msra.mxu0 %v119
    %206 = vmatprep.subr.bf16.mxu0 0
    %207 = vmatpush1.bf16.msra.mxu0 %v120
    %208 = vmatprep.subr.bf16.mxu0 0
    %209 = vmatpush1.bf16.msra.mxu0 %v121
    %210 = vmatprep.subr.bf16.mxu0 0
    %211 = vmatpush1.bf16.msra.mxu0 %v122
    %212 = vmatprep.subr.bf16.mxu0 0
    %213 = vmatpush1.bf16.msra.mxu0 %v123
    %214 = vmatprep.subr.bf16.mxu0 0
    %215 = vmatpush1.bf16.msra.mxu0 0
    %216 = vmatprep.subr.bf16.mxu0 0
    %217 = vmatpush1.bf16.msra.mxu0 0
    %218 = vmatprep.subr.bf16.mxu0 0
    %219 = vmatpush1.bf16.msra.mxu0 0
    %220 = vmatprep.subr.bf16.mxu0 0
    %221 = vmatpush1.bf16.msra.mxu0 0
    %222 = vmatprep.subr.bf16.mxu0 0
    %223 = vmatpush1.bf16.msra.mxu0 0
    %224 = vmatprep.subr.bf16.mxu0 0
    %225 = vmatpush1.bf16.msra.mxu0 0
    %226 = vmatprep.subr.bf16.mxu0 0
    %227 = vmatpush1.bf16.msra.mxu0 0
    %228 = vmatprep.subr.bf16.mxu0 0
    %229 = vmatpush1.bf16.msra.mxu0 0
    %230 = vmatprep.mubr.bf16.mxu0 0
    %231 = vmatmul.mubr.bf16.gmra.mrb[0].mxu0 %v196
    %v232 = vpop.f32.mrb[0].mxu0
    %v233 = vadd.f32 0.0, %v232
    %v234 = vpop.f32.mrb[0].mxu0
    %v235 = vpop.f32.mrb[0].mxu0
    %v236 = vadd.f32 0.0, %v235
    %v237 = vpop.f32.mrb[0].mxu0
    %238 = vmatprep.mubr.bf16.mxu0 0
    %239 = vmatmul.mubr.bf16.gmra.mrb[0].mxu0 %v197
    %v240 = vpop.f32.mrb[0].mxu0
    %v241 = vadd.f32 0.0, %v240
    %v242 = vpop.f32.mrb[0].mxu0
    %v243 = vpop.f32.mrb[0].mxu0
    %v244 = vpop.f32.mrb[0].mxu0
    %245 = vdwg.mxu0
    %246 = vmatprep.subr.bf16.mxu0 0
    %247 = vmatpush1.bf16.msra.mxu0 %v116
    %248 = vmatprep.subr.bf16.mxu0 0
    %249 = vmatpush1.bf16.msra.mxu0 %v117
    %250 = vmatprep.subr.bf16.mxu0 0
    %251 = vmatpush1.bf16.msra.mxu0 %v118
    %252 = vmatprep.subr.bf16.mxu0 0
    %253 = vmatpush1.bf16.msra.mxu0 %v119
    %254 = vmatprep.subr.bf16.mxu0 0
    %255 = vmatpush1.bf16.msra.mxu0 %v120
    %256 = vmatprep.subr.bf16.mxu0 0
    %257 = vmatpush1.bf16.msra.mxu0 %v121
    %258 = vmatprep.subr.bf16.mxu0 0
    %259 = vmatpush1.bf16.msra.mxu0 %v122
    %260 = vmatprep.subr.bf16.mxu0 0
    %261 = vmatpush1.bf16.msra.mxu0 %v123
    %262 = vmatprep.subr.bf16.mxu0 0
    %263 = vmatpush1.bf16.msra.mxu0 0
    %264 = vmatprep.subr.bf16.mxu0 0
    %265 = vmatpush1.bf16.msra.mxu0 0
    %266 = vmatprep.subr.bf16.mxu0 0
    %267 = vmatpush1.bf16.msra.mxu0 0
    %268 = vmatprep.subr.bf16.mxu0 0
    %269 = vmatpush1.bf16.msra.mxu0 0
    %270 = vmatprep.subr.bf16.mxu0 0
    %271 = vmatpush1.bf16.msra.mxu0 0
    %272 = vmatprep.subr.bf16.mxu0 0
    %273 = vmatpush1.bf16.msra.mxu0 0
    %274 = vmatprep.subr.bf16.mxu0 0
    %275 = vmatpush1.bf16.msra.mxu0 0
    %276 = vmatprep.subr.bf16.mxu0 0
    %277 = vmatpush1.bf16.msra.mxu0 0
    %278 = vmatprep.mubr.bf16.mxu0 0
    %279 = vmatmul.mubr.bf16.gmra.mrb[0].mxu0 %v188
    %v280 = vpop.f32.mrb[0].mxu0
    %v281 = vadd.f32 %v233, %v280
    %v282 = vpop.f32.mrb[0].mxu0
    %v283 = vpop.f32.mrb[0].mxu0
    %v284 = vadd.f32 %v236, %v283
    %v285 = vpop.f32.mrb[0].mxu0
    %286 = vmatprep.mubr.bf16.mxu0 0
    %287 = vmatmul.mubr.bf16.gmra.mrb[0].mxu0 %v189
    %v288 = vpop.f32.mrb[0].mxu0
    %v289 = vadd.f32 %v241, %v288
    %v290 = vpop.f32.mrb[0].mxu0
    %v291 = vpop.f32.mrb[0].mxu0
    %v292 = vpop.f32.mrb[0].mxu0
    %293 = vdwg.mxu0
    %v294 = vld [vmem:[#allocation4] sm:$0xff]
    %v295 = vld [vmem:[#allocation4 + $0x8] sm:$0xff]
    %v296 = vld [vmem:[#allocation4 + $0x10] sm:$0xff]
    %v297 = vpack.c.bf16 %v295, %v294
    %v298 = vpack.c.bf16 %v296, %v296
    %v299 = vunpack.c.l.bf16 %v297
    %v300 = vunpack.c.h.bf16 %v297
    %v301 = vunpack.c.l.bf16 %v298
    %v302 = vsub.f32 %v294, %v299
    %v303 = vsub.f32 %v295, %v300
    %v304 = vsub.f32 %v296, %v301
    %v305 = vpack.c.bf16 %v303, %v302
    %v306 = vpack.c.bf16 %v304, %v304
    %307 = vmatprep.subr.bf16.mxu0 0
    %308 = vmatpush1.bf16.msra.mxu0 %v177
    %309 = vmatprep.subr.bf16.mxu0 0
    %310 = vmatpush1.bf16.msra.mxu0 %v178
    %311 = vmatprep.subr.bf16.mxu0 0
    %312 = vmatpush1.bf16.msra.mxu0 %v179
    %313 = vmatprep.subr.bf16.mxu0 0
    %314 = vmatpush1.bf16.msra.mxu0 %v180
    %315 = vmatprep.subr.bf16.mxu0 0
    %316 = vmatpush1.bf16.msra.mxu0 %v181
    %317 = vmatprep.subr.bf16.mxu0 0
    %318 = vmatpush1.bf16.msra.mxu0 %v182
    %319 = vmatprep.subr.bf16.mxu0 0
    %320 = vmatpush1.bf16.msra.mxu0 %v183
    %321 = vmatprep.subr.bf16.mxu0 0
    %322 = vmatpush1.bf16.msra.mxu0 %v184
    %323 = vmatprep.subr.bf16.mxu0 0
    %324 = vmatpush1.bf16.msra.mxu0 0
    %325 = vmatprep.subr.bf16.mxu0 0
    %326 = vmatpush1.bf16.msra.mxu0 0
    %327 = vmatprep.subr.bf16.mxu0 0
    %328 = vmatpush1.bf16.msra.mxu0 0
    %329 = vmatprep.subr.bf16.mxu0 0
    %330 = vmatpush1.bf16.msra.mxu0 0
    %331 = vmatprep.subr.bf16.mxu0 0
    %332 = vmatpush1.bf16.msra.mxu0 0
    %333 = vmatprep.subr.bf16.mxu0 0
    %334 = vmatpush1.bf16.msra.mxu0 0
    %335 = vmatprep.subr.bf16.mxu0 0
    %336 = vmatpush1.bf16.msra.mxu0 0
    %337 = vmatprep.subr.bf16.mxu0 0
    %338 = vmatpush1.bf16.msra.mxu0 0
    %339 = vmatprep.mubr.bf16.mxu0 0
    %340 = vmatmul.mubr.bf16.gmra.mrb[0].mxu0 %v305
    %v341 = vpop.f32.mrb[0].mxu0
    %v342 = vadd.f32 0.0, %v341
    %v343 = vpop.f32.mrb[0].mxu0
    %v344 = vpop.f32.mrb[0].mxu0
    %v345 = vadd.f32 0.0, %v344
    %v346 = vpop.f32.mrb[0].mxu0
    %347 = vmatprep.mubr.bf16.mxu0 0
    %348 = vmatmul.mubr.bf16.gmra.mrb[0].mxu0 %v306
    %v349 = vpop.f32.mrb[0].mxu0
    %v350 = vadd.f32 0.0, %v349
    %v351 = vpop.f32.mrb[0].mxu0
    %v352 = vpop.f32.mrb[0].mxu0
    %v353 = vpop.f32.mrb[0].mxu0
    %354 = vdwg.mxu0
    %355 = vmatprep.subr.bf16.mxu0 0
    %356 = vmatpush1.bf16.msra.mxu0 %v177
    %357 = vmatprep.subr.bf16.mxu0 0
    %358 = vmatpush1.bf16.msra.mxu0 %v178
    %359 = vmatprep.subr.bf16.mxu0 0
    %360 = vmatpush1.bf16.msra.mxu0 %v179
    %361 = vmatprep.subr.bf16.mxu0 0
    %362 = vmatpush1.bf16.msra.mxu0 %v180
    %363 = vmatprep.subr.bf16.mxu0 0
    %364 = vmatpush1.bf16.msra.mxu0 %v181
    %365 = vmatprep.subr.bf16.mxu0 0
    %366 = vmatpush1.bf16.msra.mxu0 %v182
    %367 = vmatprep.subr.bf16.mxu0 0
    %368 = vmatpush1.bf16.msra.mxu0 %v183
    %369 = vmatprep.subr.bf16.mxu0 0
    %370 = vmatpush1.bf16.msra.mxu0 %v184
    %371 = vmatprep.subr.bf16.mxu0 0
    %372 = vmatpush1.bf16.msra.mxu0 0
    %373 = vmatprep.subr.bf16.mxu0 0
    %374 = vmatpush1.bf16.msra.mxu0 0
    %375 = vmatprep.subr.bf16.mxu0 0
    %376 = vmatpush1.bf16.msra.mxu0 0
    %377 = vmatprep.subr.bf16.mxu0 0
    %378 = vmatpush1.bf16.msra.mxu0 0
    %379 = vmatprep.subr.bf16.mxu0 0
    %380 = vmatpush1.bf16.msra.mxu0 0
    %381 = vmatprep.subr.bf16.mxu0 0
    %382 = vmatpush1.bf16.msra.mxu0 0
    %383 = vmatprep.subr.bf16.mxu0 0
    %384 = vmatpush1.bf16.msra.mxu0 0
    %385 = vmatprep.subr.bf16.mxu0 0
    %386 = vmatpush1.bf16.msra.mxu0 0
    %387 = vmatprep.mubr.bf16.mxu0 0
    %388 = vmatmul.mubr.bf16.gmra.mrb[0].mxu0 %v297
    %v389 = vpop.f32.mrb[0].mxu0
    %v390 = vadd.f32 %v342, %v389
    %v391 = vpop.f32.mrb[0].mxu0
    %v392 = vpop.f32.mrb[0].mxu0
    %v393 = vadd.f32 %v345, %v392
    %v394 = vpop.f32.mrb[0].mxu0
    %395 = vmatprep.mubr.bf16.mxu0 0
    %396 = vmatmul.mubr.bf16.gmra.mrb[0].mxu0 %v298
    %v397 = vpop.f32.mrb[0].mxu0
    %v398 = vadd.f32 %v350, %v397
    %v399 = vpop.f32.mrb[0].mxu0
    %v400 = vpop.f32.mrb[0].mxu0
    %v401 = vpop.f32.mrb[0].mxu0
    %402 = vdwg.mxu0
    %v403 = vmul.f32 %v281, %v390
    %v404 = vmul.f32 %v284, %v393
    %v405 = vmul.f32 %v289, %v398
    %v406 = vadd.f32 %v403, %v404
    %v407 = vadd.f32 %v406, %v405
    %v408 = vrot.slane %v407, 4
    %v409 = vadd.f32 %v407, %v408
    %v410 = vrot.slane %v409, 2
    %v411 = vadd.f32 %v409, %v410
    %v412 = vrot.slane %v411, 1
    %v413 = vadd.f32 %v411, %v412
    %414 = vst [vmem:[%s4] sm:$0x1] %v413
    // Predicated region
    $region26: #{matrix_factorization_forward.1} parent=1 // pred_check
      _
    $region27: #{matrix_factorization_forward.1} parent=1 // pred_check_branch
      %416 = sbr.rel (0) target = $region29
    $region28: #{matrix_factorization_forward.1} parent=1 // pred_region
      _
    $region29: #{matrix_factorization_forward.1} parent=1 // pred_fallthru
      _
    // Predicated region
    $region30: #{matrix_factorization_forward.1} parent=1 // pred_check
      _
    $region31: #{matrix_factorization_forward.1} parent=1 // pred_check_branch
      %418 = sbr.rel (0) target = $region33
    $region32: #{matrix_factorization_forward.1} parent=1 // pred_region
      _
    $region33: #{matrix_factorization_forward.1} parent=1 // pred_fallthru
      _
    %419 = vsyncpa [#allocation3], 1
    %420 = vsyncpa [#allocation5], 1

</llo_original>
